<compile_context>
chip_gen: v5e
topology: v5e:2x2
jax: 0.10.0
libtpu: 0.0.40
codegen_flags: <defaults>
</compile_context>

<pallas_src>
import jax
import jax.numpy as jnp
from jax.experimental import pallas as pl
from jax.experimental.pallas import tpu as pltpu


def _copy_kernel(x_ref, o_ref):
    # Pure pass-through on the current VMEM tile.
    o_ref[...] = x_ref[...]


# Lane width: large multiple of 128 so every vreg store is unmasked (lane-dense
# output was the biggest single measured lever for copy-class kernels).
_LANE_WIDTH = 1024
# Target bytes per VMEM tile buffer. Double-buffered input + output costs ~4x
# this, i.e. ~8 MiB — fits the scoped VMEM default on every generation
# (16 MiB v5e, 32 MiB v6e/v7x) without raising vmem_limit_bytes.
_TILE_BYTES = 2 * 1024 * 1024


def _sublane_packing(dtype) -> int:
    # Keep the second-to-last block dim a multiple of the packed sublane count
    # (8 for 32-bit, 16 for bf16, 32 for int8) so the copy stays pure aligned
    # vld/vst with no repack work.
    itemsize = jnp.dtype(dtype).itemsize
    return {4: 8, 2: 16, 1: 32}.get(itemsize, 8)


def identity(x: jax.Array) -> jax.Array:
    """nn.Identity forward: zero work — return the input unchanged.

    This is the fastest correct implementation (no kernel launch, no HBM
    traffic), matching the performance review's top recommendation.
    """
    return x


def identity_copy(x: jax.Array) -> jax.Array:
    """Materialized copy of ``x`` via a lane-dense, tiled Pallas copy kernel.

    Only needed when a fresh output buffer is explicitly required; plain
    ``identity`` should be used otherwise.
    """
    orig_shape = x.shape
    dtype = x.dtype
    n = x.size
    if n == 0:
        return x

    itemsize = jnp.dtype(dtype).itemsize
    packing = _sublane_packing(dtype)

    # --- Flatten to a lane-dense 2D slab: (rows, _LANE_WIDTH). --------------
    flat = x.reshape(-1)
    rows = pl.cdiv(n, _LANE_WIDTH)

    # Tile rows: big enough to amortize the ~0.35us per-grid-step overhead,
    # small enough that 2 buffers x (in + out) fit VMEM on all generations
    # (v7x has only 64 MiB physical / 32 MiB scoped default).
    tile_rows = max(_TILE_BYTES // (_LANE_WIDTH * itemsize), packing)
    tile_rows = (tile_rows // packing) * packing

    if rows <= tile_rows:
        # Single block equal to the full (padded) array: no (8,128) constraint
        # because block dims equal the array dims.
        tile_rows = rows
        padded_rows = rows
    else:
        padded_rows = pl.cdiv(rows, tile_rows) * tile_rows

    padded_n = padded_rows * _LANE_WIDTH
    if padded_n != n:
        flat = jnp.pad(flat, (0, padded_n - n))
    slab = flat.reshape(padded_rows, _LANE_WIDTH)

    grid = (padded_rows // tile_rows,)

    out = pl.pallas_call(
        _copy_kernel,
        out_shape=jax.ShapeDtypeStruct((padded_rows, _LANE_WIDTH), dtype),
        grid_spec=pltpu.PrefetchScalarGridSpec(
            num_scalar_prefetch=0,
            grid=grid,
            in_specs=[pl.BlockSpec((tile_rows, _LANE_WIDTH), lambda i: (i, 0))],
            out_specs=pl.BlockSpec((tile_rows, _LANE_WIDTH), lambda i: (i, 0)),
        ),
        compiler_params=pltpu.CompilerParams(
            # Purely memory-bound copy: shard the grid across both
            # TensorCores on v7x; harmless on single-TC chips.
            dimension_semantics=("parallel",),
        ),
    )(slab)

    if padded_n != n:
        out = out.reshape(-1)[:n]
    return out.reshape(orig_shape)


if __name__ == "__main__":
    key = jax.random.PRNGKey(0)
    # NCHW input, small shapes: batch=2, channels=4, spatial=16x16
    x = jax.random.normal(key, (2, 4, 16, 16), dtype=jnp.float32)

    # Zero-cost path (what nn.Identity semantically is).
    y_fast = identity(x)

    # Pallas kernel path (materialized copy), exercised once.
    y_copy = identity_copy(x)
    jax.block_until_ready(y_copy)

    assert y_fast.shape == x.shape and y_fast.dtype == x.dtype
    assert y_copy.shape == x.shape and y_copy.dtype == x.dtype
    assert jnp.array_equal(y_fast, x)
    assert jnp.array_equal(y_copy, x)
    print("KERNEL_OK")
</pallas_src>

<mosaic_0001>
module attributes {stable_mosaic.version = 11 : i64} {
  func.func @_copy_kernel(%arg0: i32, %arg1: memref<2x1024xf32, #tpu.memory_space<vmem>>, %arg2: memref<2x1024xf32, #tpu.memory_space<vmem>>) attributes {dimension_semantics = [#tpu.dimension_semantics<parallel>], iteration_bounds = array<i64: 1>, scalar_prefetch = 0 : i64, scratch_operands = 0 : i64, tpu.core_type = #tpu.core_type<tc>, window_params = [{transform_indices = @transform_0, window_bounds = array<i64: 2, 1024>}, {transform_indices = @transform_1, window_bounds = array<i64: 2, 1024>}]} {
    %c0 = arith.constant 0 : index
    %c0_0 = arith.constant 0 : index
    %0 = vector.load %arg1[%c0, %c0_0] : memref<2x1024xf32, #tpu.memory_space<vmem>>, vector<2x1024xf32>
    %c0_1 = arith.constant 0 : index
    %c0_2 = arith.constant 0 : index
    %1 = vector.load %arg2[%c0_1, %c0_2] : memref<2x1024xf32, #tpu.memory_space<vmem>>, vector<2x1024xf32>
    tpu.vector_store %arg2[%c0_1, %c0_2], %0 {strides = array<i32>} : memref<2x1024xf32, #tpu.memory_space<vmem>>, vector<2x1024xf32>,
    return
  }
  func.func @transform_0(%arg0: i32) -> (i32, i32) {
    %c0_i32 = arith.constant 0 : i32
    %c0_i32_0 = arith.constant 0 : i32
    return %arg0, %c0_i32 : i32, i32
  }
  func.func @transform_1(%arg0: i32) -> (i32, i32) {
    %c0_i32 = arith.constant 0 : i32
    %c0_i32_0 = arith.constant 0 : i32
    return %arg0, %c0_i32 : i32, i32
  }
}

</mosaic_0001>

<llo_original>
// kernel: tpu_custom_call.1
$region0: #{tpu_custom_call.1}
  #allocation0 [shape = 'u32[]', space=smem, size = 0x4, offset = 0x4, fixed_abs, tag = 'smem constant byte address 0x4 - core index']
  #allocation1 [shape = 'u32[72,128]{1,0:T(1,128)}', space=vmem, size = 0x9000, scoped, tag = 'internal scratch']
  %s0 = inlined_call_operand.hbm [shape: f32[2,1024], index: 0, kind: input, shape index: {}]
  %s1 = inlined_call_operand.hbm [shape: f32[2,1024], index: 1, kind: output, shape index: {}]
  %s2 = sld [smem:[#allocation0]]
  $region18: #{tpu_custom_call.1} parent=0
    _
  %s4 = ssub.s32 1, %s2
  %s5 = scalar_select 0, %s4, %s2
  $region1: #{tpu_custom_call.1} parent=0
    #allocation2 [shape = 'u8[8192]{0}', space=vmem, size = 0x2000, scoped, tag = 'input window, operand 0, single buffered']
    #allocation3 [shape = 's32[1]{0}', space=sflag, size = 0x4, scoped, tag = 'scoped memory for tpu_custom_call.1']
    #allocation4 [shape = 's32[1]{0}', space=sflag, size = 0x4, scoped, tag = 'scoped memory for tpu_custom_call.1']
    #allocation5 [shape = 'u8[8192]{0}', space=vmem, size = 0x2000, scoped, tag = 'output window, operand 0, single buffered']
    %6 = vsyncpa [#allocation3], 0
    %7 = vsyncpa [#allocation4], 0
    // Predicated region
    $region2: #{tpu_custom_call.1} parent=1 // pred_check
      _
    $region3: #{tpu_custom_call.1} parent=1 // pred_check_branch
      %9 = sbr.rel (0) target = $region5
    $region4: #{tpu_custom_call.1} parent=1 // pred_region
      %11 = vsyncadd [#allocation3], 0
      %s13 = sshll.u32 %s0, 4
      %s14 = int_to_ptr.hbm [resolvable:$true] %s13
      %s15 = sshll.u32 [#allocation2], 4
      %s16 = int_to_ptr.vmem [resolvable:$true] %s15
      %18 = dma.hbm_to_vmem [thread:$0]  %s14, 256, %s16, [#allocation3]
    $region5: #{tpu_custom_call.1} parent=1 // pred_fallthru
      _
    // Predicated region
    $region6: #{tpu_custom_call.1} parent=1 // pred_check
      _
    $region7: #{tpu_custom_call.1} parent=1 // pred_check_branch
      %20 = sbr.rel (0) target = $region9
    $region8: #{tpu_custom_call.1} parent=1 // pred_region
      %22 = dma.done [#allocation3], 256
    $region9: #{tpu_custom_call.1} parent=1 // pred_fallthru
      _
    %v23 = vld [vmem:[#allocation2] sm:$0xff]
    %v24 = vld [vmem:[#allocation2 + $0x8] sm:$0xff]
    %25 = vst [vmem:[#allocation5] sm:$0xff] %v23
    %26 = vst [vmem:[#allocation5 + $0x8] sm:$0xff] %v24
    // Predicated region
    $region10: #{tpu_custom_call.1} parent=1 // pred_check
      _
    $region11: #{tpu_custom_call.1} parent=1 // pred_check_branch
      %28 = sbr.rel (0) target = $region13
    $region12: #{tpu_custom_call.1} parent=1 // pred_region
      %30 = vsyncadd [#allocation4], 0
      %s32 = sshll.u32 [#allocation5], 4
      %s33 = int_to_ptr.vmem [resolvable:$true] %s32
      %s34 = sshll.u32 %s1, 4
      %s35 = int_to_ptr.hbm [resolvable:$true] %s34
      %37 = dma.vmem_to_hbm [thread:$0]  %s33, 256, %s35, [#allocation4]
    $region13: #{tpu_custom_call.1} parent=1 // pred_fallthru
      _
    // Predicated region
    $region14: #{tpu_custom_call.1} parent=1 // pred_check
      _
    $region15: #{tpu_custom_call.1} parent=1 // pred_check_branch
      %39 = sbr.rel (0) target = $region17
    $region16: #{tpu_custom_call.1} parent=1 // pred_region
      %41 = dma.done [#allocation4], 256
    $region17: #{tpu_custom_call.1} parent=1 // pred_fallthru
      _
    %42 = vsyncpa [#allocation3], 1
    %43 = vsyncpa [#allocation4], 1

</llo_original>
